<compile_context>
chip_gen: v7x
topology: tpu7x:2x2x1
jax: 0.10.0
libtpu: 0.0.40
codegen_flags: <defaults>
</compile_context>

<pallas_src>
import functools

import jax
import jax.numpy as jnp
from jax import lax
from jax.experimental import pallas as pl
from jax.experimental.pallas import tpu as pltpu


def _dropout_keep_mask(shape, seed_u32, tile_id_u32, p):
    """Stateless per-element keep mask: murmur3-style finalizer over the
    global element index mixed with the user seed.  Pure VPU integer ops, so
    it lowers on both the Mosaic TPU backend and the interpreter."""
    tm, d = shape
    rows = lax.broadcasted_iota(jnp.uint32, shape, 0)
    cols = lax.broadcasted_iota(jnp.uint32, shape, 1)
    # global element counter (wraps mod 2^32 for >4G-element tensors; fine for
    # a dropout mask)
    idx = (tile_id_u32 * jnp.uint32(tm) + rows) * jnp.uint32(d) + cols
    h = idx ^ (seed_u32 * jnp.uint32(0x9E3779B9))
    h = (h ^ (h >> jnp.uint32(16))) * jnp.uint32(0x85EBCA6B)
    h = (h ^ (h >> jnp.uint32(13))) * jnp.uint32(0xC2B2AE35)
    h = h ^ (h >> jnp.uint32(16))
    threshold = jnp.uint32(min(int(round(p * (2 ** 32))), 2 ** 32 - 1))
    # P(h < threshold) ~= p  ->  drop with prob p, keep with prob 1-p
    return h >= threshold


def resblock_kernel(seed_ref, x_ref, w_ref, b_ref, g_ref, beta_ref, o_ref,
                    *, p, training, eps):
    # x_ref: (TM, D) f32   w_ref: (D_out, D_in) bf16   b/g/beta: (1, D) f32
    x = x_ref[...].astype(jnp.float32)

    # ---- self.layer(x): Linear(D, D) on the MXU (bf16 operands, f32 acc) ---
    y = lax.dot_general(
        x.astype(jnp.bfloat16), w_ref[...],
        dimension_numbers=(((1,), (1,)), ((), ())),   # contract x@W.T
        preferred_element_type=jnp.float32)
    y = y + b_ref[...].astype(jnp.float32)

    # ---- self.dropout(...) (training semantics: keep w.p. 1-p, scale) ------
    if training and p > 0.0:
        seed_u32 = seed_ref[0].astype(jnp.uint32)
        tile_u32 = pl.program_id(0).astype(jnp.uint32)
        keep = _dropout_keep_mask(y.shape, seed_u32, tile_u32, p)
        y = jnp.where(keep, y * jnp.float32(1.0 / (1.0 - p)), jnp.float32(0.0))

    # ---- residual add (f32, original x) ------------------------------------
    r = x + y

    # ---- self.norm(...): LayerNorm over last dim D (f32) -------------------
    mean = jnp.mean(r, axis=-1, keepdims=True)
    centered = r - mean
    var = jnp.mean(centered * centered, axis=-1, keepdims=True)
    inv = lax.rsqrt(var + jnp.float32(eps))
    out = centered * inv * g_ref[...].astype(jnp.float32) \
          + beta_ref[...].astype(jnp.float32)

    o_ref[...] = out.astype(o_ref.dtype)


def resblock_forward(x, w, b, gamma, beta, seed, *, p=0.15, training=True,
                     eps=1e-5, tm=None):
    """x: (B, S, D) f32.  w: (D_out, D_in) torch layout.  Returns (B, S, D)."""
    B, S, D = x.shape
    n_rows = B * S

    # Large row tiles (multiple of 8 sublanes); fall back to whatever divides
    # the row count for small inputs.
    if tm is None:
        for cand in (512, 256, 128, 64, 32, 16, 8):
            if n_rows % cand == 0:
                tm = cand
                break
        else:
            tm = n_rows
    assert n_rows % tm == 0, "row count must be divisible by the row tile"

    xf = x.reshape(n_rows, D).astype(jnp.float32)
    wb = jnp.asarray(w, jnp.bfloat16)               # keep (D_out, D_in); no .T
    b2 = jnp.asarray(b, jnp.float32).reshape(1, D)
    g2 = jnp.asarray(gamma, jnp.float32).reshape(1, D)
    be2 = jnp.asarray(beta, jnp.float32).reshape(1, D)
    seed_arr = jnp.asarray([seed], jnp.int32)

    kernel = functools.partial(resblock_kernel, p=p, training=training,
                               eps=eps)

    cost = pl.CostEstimate(
        flops=2 * n_rows * D * D + 12 * n_rows * D,
        transcendentals=n_rows,                      # rsqrt per row
        bytes_accessed=4 * n_rows * D * 2 + 2 * D * D + 3 * 4 * D,
    )

    out = pl.pallas_call(
        kernel,
        out_shape=jax.ShapeDtypeStruct((n_rows, D), jnp.float32),
        grid_spec=pltpu.PrefetchScalarGridSpec(
            num_scalar_prefetch=1,                   # seed -> SMEM
            grid=(n_rows // tm,),
            in_specs=[
                pl.BlockSpec((tm, D), lambda i, seed: (i, 0)),   # x tile
                pl.BlockSpec((D, D), lambda i, seed: (0, 0)),    # weight (bf16)
                pl.BlockSpec((1, D), lambda i, seed: (0, 0)),    # bias
                pl.BlockSpec((1, D), lambda i, seed: (0, 0)),    # ln gamma
                pl.BlockSpec((1, D), lambda i, seed: (0, 0)),    # ln beta
            ],
            out_specs=pl.BlockSpec((tm, D), lambda i, seed: (i, 0)),
        ),
        compiler_params=pltpu.CompilerParams(
            dimension_semantics=("parallel",),       # rows independent -> 2 TCs on v7x
            vmem_limit_bytes=48 * 1024 * 1024,
        ),
        cost_estimate=cost,
    )(seed_arr, xf, wb, b2, g2, be2)

    return out.reshape(B, S, D)


if __name__ == "__main__":
    # Small, lane-dense shapes: (batch=2, seq=8, hidden=128).
    B, S, D = 2, 8, 128
    key = jax.random.PRNGKey(0)
    kx, kw, kb, kg, kbeta = jax.random.split(key, 5)

    x = jax.random.normal(kx, (B, S, D), dtype=jnp.float32)
    # Linear(D, D) params, torch convention: weight (out, in), bias (out,)
    w = jax.random.normal(kw, (D, D), dtype=jnp.float32) * (1.0 / jnp.sqrt(D))
    b = 0.01 * jax.random.normal(kb, (D,), dtype=jnp.float32)
    # LayerNorm params (torch default init perturbed slightly)
    gamma = jnp.ones((D,), jnp.float32) + 0.01 * jax.random.normal(kg, (D,))
    beta = 0.01 * jax.random.normal(kbeta, (D,), dtype=jnp.float32)

    # Training-mode run (in-kernel dropout mask).
    out_train = resblock_forward(x, w, b, gamma, beta, seed=1234, p=0.15,
                                 training=True)
    jax.block_until_ready(out_train)
    assert out_train.shape == (B, S, D)
    assert bool(jnp.all(jnp.isfinite(out_train)))

    # Eval-mode run checked against a pure-JAX reference (same bf16 matmul
    # operands, f32 accumulation / LayerNorm).
    out_eval = resblock_forward(x, w, b, gamma, beta, seed=0, p=0.15,
                                training=False)
    jax.block_until_ready(out_eval)

    def ref_eval(xx):
        y = jnp.einsum("bsd,ed->bse",
                       xx.astype(jnp.bfloat16), w.astype(jnp.bfloat16),
                       preferred_element_type=jnp.float32) + b
        r = xx + y
        mu = r.mean(-1, keepdims=True)
        var = ((r - mu) ** 2).mean(-1, keepdims=True)
        return (r - mu) * lax.rsqrt(var + 1e-5) * gamma + beta

    ref = ref_eval(x)
    assert jnp.allclose(out_eval, ref, atol=2e-3, rtol=2e-3), \
        float(jnp.max(jnp.abs(out_eval - ref)))

    print("KERNEL_OK")
</pallas_src>

<mosaic_0001>
module attributes {stable_mosaic.version = 11 : i64} {
  func.func @resblock_kernel(%arg0: i32, %arg1: memref<1xi32, #tpu.memory_space<smem>>, %arg2: memref<16x128xf32, #tpu.memory_space<vmem>>, %arg3: memref<128x128xbf16, #tpu.memory_space<vmem>>, %arg4: memref<1x128xf32, #tpu.memory_space<vmem>>, %arg5: memref<1x128xf32, #tpu.memory_space<vmem>>, %arg6: memref<1x128xf32, #tpu.memory_space<vmem>>, %arg7: memref<16x128xf32, #tpu.memory_space<vmem>>) attributes {dimension_semantics = [#tpu.dimension_semantics<parallel>], iteration_bounds = array<i64: 1>, scalar_prefetch = 1 : i64, scratch_operands = 0 : i64, tpu.core_type = #tpu.core_type<tc>, window_params = [{transform_indices = @transform_0, window_bounds = array<i64: 16, 128>}, {pipeline_mode = #tpu.pipeline_mode<synchronous>, transform_indices = @transform_1, window_bounds = array<i64: 128, 128>}, {pipeline_mode = #tpu.pipeline_mode<synchronous>, transform_indices = @transform_2, window_bounds = array<i64: 1, 128>}, {pipeline_mode = #tpu.pipeline_mode<synchronous>, transform_indices = @transform_3, window_bounds = array<i64: 1, 128>}, {pipeline_mode = #tpu.pipeline_mode<synchronous>, transform_indices = @transform_4, window_bounds = array<i64: 1, 128>}, {transform_indices = @transform_5, window_bounds = array<i64: 16, 128>}]} {
    %c0 = arith.constant 0 : index
    %c0_0 = arith.constant 0 : index
    %0 = vector.load %arg2[%c0, %c0_0] : memref<16x128xf32, #tpu.memory_space<vmem>>, vector<16x128xf32>
    %1 = arith.truncf %0 : vector<16x128xf32> to vector<16x128xbf16>
    %c0_1 = arith.constant 0 : index
    %c0_2 = arith.constant 0 : index
    %2 = vector.load %arg3[%c0_1, %c0_2] : memref<128x128xbf16, #tpu.memory_space<vmem>>, vector<128x128xbf16>
    %cst = arith.constant dense<0.000000e+00> : vector<16x128xf32>
    %3 = tpu.matmul %1, %2, %cst {dimension_numbers = #tpu.dot_dimension_numbers<[1], [1], [0], [0], [0, 0, 1, 0], [], []>} : vector<16x128xbf16>, vector<128x128xbf16>, vector<16x128xf32> -> vector<16x128xf32>
    %c0_3 = arith.constant 0 : index
    %c0_4 = arith.constant 0 : index
    %4 = vector.load %arg4[%c0_3, %c0_4] : memref<1x128xf32, #tpu.memory_space<vmem>>, vector<1x128xf32>
    %5 = vector.broadcast %4 : vector<1x128xf32> to vector<16x128xf32>
    %6 = arith.addf %3, %5 : vector<16x128xf32>
    %c0_5 = arith.constant 0 : index
    %7 = memref.load %arg1[%c0_5] : memref<1xi32, #tpu.memory_space<smem>>
    %8 = tpu.iota {dimensions = array<i32: 0>} : vector<16x128xi32>
    %9 = tpu.iota {dimensions = array<i32: 1>} : vector<16x128xi32>
    %c16_i32 = arith.constant 16 : i32
    %10 = arith.muli %arg0, %c16_i32 : i32
    %11 = vector.broadcast %10 : i32 to vector<16x128xi32>
    %12 = arith.addi %11, %8 : vector<16x128xi32>
    %c128_i32 = arith.constant 128 : i32
    %13 = vector.broadcast %c128_i32 : i32 to vector<16x128xi32>
    %14 = arith.muli %12, %13 : vector<16x128xi32>
    %15 = arith.addi %14, %9 : vector<16x128xi32>
    %c-1640531527_i32 = arith.constant -1640531527 : i32
    %16 = arith.muli %7, %c-1640531527_i32 : i32
    %17 = vector.broadcast %16 : i32 to vector<16x128xi32>
    %18 = arith.xori %15, %17 : vector<16x128xi32>
    %c16_i32_6 = arith.constant 16 : i32
    %19 = vector.broadcast %c16_i32_6 : i32 to vector<16x128xi32>
    %20 = arith.shrui %18, %19 : vector<16x128xi32>
    %21 = arith.xori %18, %20 : vector<16x128xi32>
    %c-2048144789_i32 = arith.constant -2048144789 : i32
    %22 = vector.broadcast %c-2048144789_i32 : i32 to vector<16x128xi32>
    %23 = arith.muli %21, %22 : vector<16x128xi32>
    %c13_i32 = arith.constant 13 : i32
    %24 = vector.broadcast %c13_i32 : i32 to vector<16x128xi32>
    %25 = arith.shrui %23, %24 : vector<16x128xi32>
    %26 = arith.xori %23, %25 : vector<16x128xi32>
    %c-1028477387_i32 = arith.constant -1028477387 : i32
    %27 = vector.broadcast %c-1028477387_i32 : i32 to vector<16x128xi32>
    %28 = arith.muli %26, %27 : vector<16x128xi32>
    %c16_i32_7 = arith.constant 16 : i32
    %29 = vector.broadcast %c16_i32_7 : i32 to vector<16x128xi32>
    %30 = arith.shrui %28, %29 : vector<16x128xi32>
    %31 = arith.xori %28, %30 : vector<16x128xi32>
    %c644245094_i32 = arith.constant 644245094 : i32
    %32 = vector.broadcast %c644245094_i32 : i32 to vector<16x128xi32>
    %33 = arith.cmpi uge, %31, %32 : vector<16x128xi32>
    %cst_8 = arith.constant 1.17647064 : f32
    %34 = vector.broadcast %cst_8 : f32 to vector<16x128xf32>
    %35 = arith.mulf %6, %34 : vector<16x128xf32>
    %cst_9 = arith.constant 0.000000e+00 : f32
    %36 = vector.broadcast %cst_9 : f32 to vector<16x128xf32>
    %37 = arith.select %33, %35, %36 : vector<16x128xi1>, vector<16x128xf32>
    %38 = arith.addf %0, %37 : vector<16x128xf32>
    %cst_10 = arith.constant dense<0.000000e+00> : vector<16xf32>
    %39 = vector.multi_reduction <add>, %38, %cst_10 [1] : vector<16x128xf32> to vector<16xf32>
    %40 = vector.shape_cast %39 : vector<16xf32> to vector<16x1xf32>
    %cst_11 = arith.constant 1.280000e+02 : f32
    %41 = vector.broadcast %cst_11 : f32 to vector<16x1xf32>
    %42 = arith.divf %40, %41 : vector<16x1xf32>
    %43 = vector.broadcast %42 : vector<16x1xf32> to vector<16x128xf32>
    %44 = arith.subf %38, %43 : vector<16x128xf32>
    %45 = arith.mulf %44, %44 : vector<16x128xf32>
    %cst_12 = arith.constant dense<0.000000e+00> : vector<16xf32>
    %46 = vector.multi_reduction <add>, %45, %cst_12 [1] : vector<16x128xf32> to vector<16xf32>
    %47 = vector.shape_cast %46 : vector<16xf32> to vector<16x1xf32>
    %cst_13 = arith.constant 1.280000e+02 : f32
    %48 = vector.broadcast %cst_13 : f32 to vector<16x1xf32>
    %49 = arith.divf %47, %48 : vector<16x1xf32>
    %cst_14 = arith.constant 9.99999974E-6 : f32
    %50 = vector.broadcast %cst_14 : f32 to vector<16x1xf32>
    %51 = arith.addf %49, %50 : vector<16x1xf32>
    %52 = math.rsqrt %51 : vector<16x1xf32>
    %53 = vector.broadcast %52 : vector<16x1xf32> to vector<16x128xf32>
    %54 = arith.mulf %44, %53 : vector<16x128xf32>
    %c0_15 = arith.constant 0 : index
    %c0_16 = arith.constant 0 : index
    %55 = vector.load %arg5[%c0_15, %c0_16] : memref<1x128xf32, #tpu.memory_space<vmem>>, vector<1x128xf32>
    %56 = vector.broadcast %55 : vector<1x128xf32> to vector<16x128xf32>
    %57 = arith.mulf %54, %56 : vector<16x128xf32>
    %c0_17 = arith.constant 0 : index
    %c0_18 = arith.constant 0 : index
    %58 = vector.load %arg6[%c0_17, %c0_18] : memref<1x128xf32, #tpu.memory_space<vmem>>, vector<1x128xf32>
    %59 = vector.broadcast %58 : vector<1x128xf32> to vector<16x128xf32>
    %60 = arith.addf %57, %59 : vector<16x128xf32>
    %c0_19 = arith.constant 0 : index
    %c0_20 = arith.constant 0 : index
    %61 = vector.load %arg7[%c0_19, %c0_20] : memref<16x128xf32, #tpu.memory_space<vmem>>, vector<16x128xf32>
    tpu.vector_store %arg7[%c0_19, %c0_20], %60 {strides = array<i32>} : memref<16x128xf32, #tpu.memory_space<vmem>>, vector<16x128xf32>,
    return
  }
  func.func @transform_0(%arg0: i32, %arg1: memref<1xi32, #tpu.memory_space<smem>>) -> (i32, i32) {
    %c0_i32 = arith.constant 0 : i32
    %c0_i32_0 = arith.constant 0 : i32
    return %arg0, %c0_i32 : i32, i32
  }
  func.func @transform_1(%arg0: i32, %arg1: memref<1xi32, #tpu.memory_space<smem>>) -> (i32, i32) {
    %c0_i32 = arith.constant 0 : i32
    %c0_i32_0 = arith.constant 0 : i32
    %c0_i32_1 = arith.constant 0 : i32
    return %c0_i32, %c0_i32_0 : i32, i32
  }
  func.func @transform_2(%arg0: i32, %arg1: memref<1xi32, #tpu.memory_space<smem>>) -> (i32, i32) {
    %c0_i32 = arith.constant 0 : i32
    %c0_i32_0 = arith.constant 0 : i32
    %c0_i32_1 = arith.constant 0 : i32
    return %c0_i32, %c0_i32_0 : i32, i32
  }
  func.func @transform_3(%arg0: i32, %arg1: memref<1xi32, #tpu.memory_space<smem>>) -> (i32, i32) {
    %c0_i32 = arith.constant 0 : i32
    %c0_i32_0 = arith.constant 0 : i32
    %c0_i32_1 = arith.constant 0 : i32
    return %c0_i32, %c0_i32_0 : i32, i32
  }
  func.func @transform_4(%arg0: i32, %arg1: memref<1xi32, #tpu.memory_space<smem>>) -> (i32, i32) {
    %c0_i32 = arith.constant 0 : i32
    %c0_i32_0 = arith.constant 0 : i32
    %c0_i32_1 = arith.constant 0 : i32
    return %c0_i32, %c0_i32_0 : i32, i32
  }
  func.func @transform_5(%arg0: i32, %arg1: memref<1xi32, #tpu.memory_space<smem>>) -> (i32, i32) {
    %c0_i32 = arith.constant 0 : i32
    %c0_i32_0 = arith.constant 0 : i32
    return %arg0, %c0_i32 : i32, i32
  }
}

</mosaic_0001>

<llo_original>
// kernel: tpu_custom_call.1
$region0: #{tpu_custom_call.1}
  #allocation0 [shape = 'u32[]', space=smem, size = 0x4, offset = 0x4, fixed_abs, tag = 'smem constant byte address 0x4 - core index']
  #allocation1 [shape = 'u32[144,128]{1,0:T(1,128)}', space=vmem, size = 0x12000, scoped, tag = 'internal scratch']
  #allocation2 [shape = 's32[1]{0}', space=sflag, size = 0x4, scoped, tag = 'scoped memory for tpu_custom_call.1']
  #allocation3 [shape = 's32[1]{0:T(128)S(6)}', space=smem, size = 0x200, scoped, tag = 'prefetched SMEM operand 0']
  %s0 = inlined_call_operand.<no memory space> [shape: s32[1], index: 0, kind: input, shape index: {}]
  %s1 = inlined_call_operand.hbm [shape: f32[16,128], index: 1, kind: input, shape index: {}]
  %s2 = inlined_call_operand.hbm [shape: bf16[128,128], index: 2, kind: input, shape index: {}]
  %s3 = inlined_call_operand.vmem [shape: f32[1,128], index: 3, kind: input, shape index: {}]
  %s4 = inlined_call_operand.vmem [shape: f32[1,128], index: 4, kind: input, shape index: {}]
  %s5 = inlined_call_operand.vmem [shape: f32[1,128], index: 5, kind: input, shape index: {}]
  %s6 = inlined_call_operand.hbm [shape: f32[16,128], index: 6, kind: output, shape index: {}]
  %s7 = sld [smem:[#allocation0]]
  $region38: #{tpu_custom_call.1} parent=0
    _
  %s9 = ssub.s32 1, %s7
  %s10 = scalar_select 0, %s9, %s7
  %11 = sst [smem:[#allocation3]] %s0
  $region1: #{tpu_custom_call.1} parent=0
    #allocation4 [shape = 'u8[8192]{0}', space=vmem, size = 0x2000, scoped, tag = 'input window, operand 1, single buffered']
    #allocation5 [shape = 's32[1]{0}', space=sflag, size = 0x4, scoped, tag = 'scoped memory for tpu_custom_call.1']
    #allocation6 [shape = 's32[1]{0}', space=sflag, size = 0x4, scoped, tag = 'scoped memory for tpu_custom_call.1']
    #allocation7 [shape = 'u8[32768]{0}', space=vmem, size = 0x8000, scoped, tag = 'input window, operand 2, single buffered']
    #allocation8 [shape = 's32[1]{0}', space=sflag, size = 0x4, scoped, tag = 'scoped memory for tpu_custom_call.1']
    #allocation9 [shape = 'u8[8192]{0}', space=vmem, size = 0x2000, scoped, tag = 'output window, operand 0, single buffered']
    %12 = vsyncpa [#allocation5], 0
    %13 = vsyncpa [#allocation8], 0
    %14 = vsyncpa [#allocation6], 0
    // Predicated region
    $region2: #{tpu_custom_call.1} parent=1 // pred_check
      _
    $region3: #{tpu_custom_call.1} parent=1 // pred_check_branch
      %16 = sbr.rel (0) target = $region5
    $region4: #{tpu_custom_call.1} parent=1 // pred_region
      %s18 = ssub.s32 256, 256
      %19 = vsyncadd [#allocation5], %s18
      %s20 = sshll.u32 [#allocation4], 4
      %s21 = int_to_ptr.vmem [resolvable:$true] %s20
      %26 = dma.hbm_to_vmem [thread:$0]  %s1, 256, %s21, [#allocation5], 128, 128, 8
    $region5: #{tpu_custom_call.1} parent=1 // pred_fallthru
      _
    // Predicated region
    $region6: #{tpu_custom_call.1} parent=1 // pred_check
      _
    $region7: #{tpu_custom_call.1} parent=1 // pred_check_branch
      %28 = sbr.rel (0) target = $region9
    $region8: #{tpu_custom_call.1} parent=1 // pred_region
      %s30 = ssub.s32 1024, 1024
      %31 = vsyncadd [#allocation8], %s30
      %s32 = sshll.u32 [#allocation7], 4
      %s33 = int_to_ptr.vmem [resolvable:$true] %s32
      %38 = dma.hbm_to_vmem [thread:$0]  %s2, 1024, %s33, [#allocation8], 64, 64, 4
    $region9: #{tpu_custom_call.1} parent=1 // pred_fallthru
      _
    // Predicated region
    $region10: #{tpu_custom_call.1} parent=1 // pred_check
      _
    $region11: #{tpu_custom_call.1} parent=1 // pred_check_branch
      %40 = sbr.rel (0) target = $region13
    $region12: #{tpu_custom_call.1} parent=1 // pred_region
      _
    $region13: #{tpu_custom_call.1} parent=1 // pred_fallthru
      _
    // Predicated region
    $region14: #{tpu_custom_call.1} parent=1 // pred_check
      _
    $region15: #{tpu_custom_call.1} parent=1 // pred_check_branch
      %42 = sbr.rel (0) target = $region17
    $region16: #{tpu_custom_call.1} parent=1 // pred_region
      _
    $region17: #{tpu_custom_call.1} parent=1 // pred_fallthru
      _
    // Predicated region
    $region18: #{tpu_custom_call.1} parent=1 // pred_check
      _
    $region19: #{tpu_custom_call.1} parent=1 // pred_check_branch
      %44 = sbr.rel (0) target = $region21
    $region20: #{tpu_custom_call.1} parent=1 // pred_region
      _
    $region21: #{tpu_custom_call.1} parent=1 // pred_fallthru
      _
    // Predicated region
    $region22: #{tpu_custom_call.1} parent=1 // pred_check
      _
    $region23: #{tpu_custom_call.1} parent=1 // pred_check_branch
      %46 = sbr.rel (0) target = $region25
    $region24: #{tpu_custom_call.1} parent=1 // pred_region
      %47 = dma.done [#allocation5], 256
    $region25: #{tpu_custom_call.1} parent=1 // pred_fallthru
      _
    // Predicated region
    $region26: #{tpu_custom_call.1} parent=1 // pred_check
      _
    $region27: #{tpu_custom_call.1} parent=1 // pred_check_branch
      %49 = sbr.rel (0) target = $region29
    $region28: #{tpu_custom_call.1} parent=1 // pred_region
      %50 = dma.done [#allocation8], 1024
    $region29: #{tpu_custom_call.1} parent=1 // pred_fallthru
      _
    %v52 = vld [vmem:[#allocation4] sm:$0xff]
    %v53 = vld [vmem:[#allocation4 + $0x8] sm:$0xff]
    %v54 = vpack.c.bf16 %v53, %v52
    %v55 = vld [vmem:[#allocation7] sm:$0xf]
    %v56 = vld [vmem:[#allocation7 + $0x4] sm:$0xf]
    %v57 = vld [vmem:[#allocation7 + $0x8] sm:$0xf]
    %v58 = vld [vmem:[#allocation7 + $0xc] sm:$0xf]
    %v59 = vld [vmem:[#allocation7 + $0x10] sm:$0xf]
    %v60 = vld [vmem:[#allocation7 + $0x14] sm:$0xf]
    %v61 = vld [vmem:[#allocation7 + $0x18] sm:$0xf]
    %v62 = vld [vmem:[#allocation7 + $0x1c] sm:$0xf]
    %v63 = vld [vmem:[#allocation7 + $0x20] sm:$0xf]
    %v64 = vld [vmem:[#allocation7 + $0x24] sm:$0xf]
    %v65 = vld [vmem:[#allocation7 + $0x28] sm:$0xf]
    %v66 = vld [vmem:[#allocation7 + $0x2c] sm:$0xf]
    %v67 = vld [vmem:[#allocation7 + $0x30] sm:$0xf]
    %v68 = vld [vmem:[#allocation7 + $0x34] sm:$0xf]
    %v69 = vld [vmem:[#allocation7 + $0x38] sm:$0xf]
    %v70 = vld [vmem:[#allocation7 + $0x3c] sm:$0xf]
    %v71 = vld [vmem:[%s3] sm:$0x1]
    %v73 = vlaneseq
    %v74 = vshrl.u32 %v73, 7
    %v75 = vsub.s32 0, %v74
    %v76 = vrot.slane %v71, %v75
    %v94 = vunpack.c.l.b16 %v55
    %v95 = vunpack.c.l.b16 %v56
    %v96 = vunpack.c.l.b16 %v57
    %v97 = vunpack.c.l.b16 %v58
    %v98 = vunpack.c.l.b16 %v59
    %v99 = vunpack.c.l.b16 %v60
    %v100 = vunpack.c.l.b16 %v61
    %v101 = vunpack.c.l.b16 %v62
    %v102 = vunpack.c.l.b16 %v63
    %v103 = vunpack.c.l.b16 %v64
    %v104 = vunpack.c.l.b16 %v65
    %v105 = vunpack.c.l.b16 %v66
    %v106 = vunpack.c.l.b16 %v67
    %v107 = vunpack.c.l.b16 %v68
    %v108 = vunpack.c.l.b16 %v69
    %v109 = vunpack.c.l.b16 %v70
    %v110 = vpack.c.b16 %v95, %v94
    %v111 = vpack.c.b16 %v97, %v96
    %v112 = vpack.c.b16 %v99, %v98
    %v113 = vpack.c.b16 %v101, %v100
    %v114 = vpack.c.b16 %v103, %v102
    %v115 = vpack.c.b16 %v105, %v104
    %v116 = vpack.c.b16 %v107, %v106
    %v117 = vpack.c.b16 %v109, %v108
    %126 = vmatprep.subr.bf16.mxu0 0
    %127 = vmatpush1.bf16.xpose.msra.mxu0 %v110
    %128 = vmatprep.subr.bf16.mxu0 0
    %129 = vmatpush1.bf16.xpose.msra.mxu0 %v111
    %130 = vmatprep.subr.bf16.mxu0 0
    %131 = vmatpush1.bf16.xpose.msra.mxu0 %v112
    %132 = vmatprep.subr.bf16.mxu0 0
    %133 = vmatpush1.bf16.xpose.msra.mxu0 %v113
    %134 = vmatprep.subr.bf16.mxu0 0
    %135 = vmatpush1.bf16.xpose.msra.mxu0 %v114
    %136 = vmatprep.subr.bf16.mxu0 0
    %137 = vmatpush1.bf16.xpose.msra.mxu0 %v115
    %138 = vmatprep.subr.bf16.mxu0 0
    %139 = vmatpush1.bf16.xpose.msra.mxu0 %v116
    %140 = vmatprep.subr.bf16.mxu0 0
    %141 = vmatpush1.bf16.xpose.msra.mxu0 %v117
    %142 = vmatprep.subr.bf16.mxu0 0
    %143 = vmatpush1.bf16.xpose.msra.mxu0 0
    %144 = vmatprep.subr.bf16.mxu0 0
    %145 = vmatpush1.bf16.xpose.msra.mxu0 0
    %146 = vmatprep.subr.bf16.mxu0 0
    %147 = vmatpush1.bf16.xpose.msra.mxu0 0
    %148 = vmatprep.subr.bf16.mxu0 0
    %149 = vmatpush1.bf16.xpose.msra.mxu0 0
    %150 = vmatprep.subr.bf16.mxu0 0
    %151 = vmatpush1.bf16.xpose.msra.mxu0 0
    %152 = vmatprep.subr.bf16.mxu0 0
    %153 = vmatpush1.bf16.xpose.msra.mxu0 0
    %154 = vmatprep.subr.bf16.mxu0 0
    %155 = vmatpush1.bf16.xpose.msra.mxu0 0
    %156 = vmatprep.subr.bf16.mxu0 0
    %157 = vmatpush1.bf16.xpose.msra.mxu0 0
    %158 = vmatprep.mubr.bf16.mxu0 0
    %159 = vmatmul.mubr.bf16.gmra.mrb[0].mxu0 %v54
    %v160 = vpop.f32.mrb[0].mxu0
    %v161 = vadd.f32 %v76, %v160
    %v162 = vpop.f32.mrb[0].mxu0
    %v163 = vpop.f32.mrb[0].mxu0
    %v164 = vadd.f32 %v76, %v163
    %v165 = vpop.f32.mrb[0].mxu0
    %166 = vdwg.mxu0
    %s167 = sld [smem:[#allocation3]]
    %v168 = vlaneseq
    %v169 = vshrl.u32 %v168, 7
    %v170 = vadd.s32 %v169, 8
    %v171 = vlaneseq
    %v172 = vand.u32 %v171, 127
    %s173 = smul.u32 0, 16
    %v174 = vstv %s173
    %v175 = vadd.s32 %v174, %v169
    %v176 = vadd.s32 %v174, %v170
    %v177 = vmul.u32 %v175, 128
    %v178 = vmul.u32 %v176, 128
    %v179 = vadd.s32 %v177, %v172
    %v180 = vadd.s32 %v178, %v172
    %s181 = smul.u32 %s167, 2654435769
    %v182 = vstv %s181
    %v183 = vxor.u32 %v179, %v182
    %v184 = vxor.u32 %v180, %v182
    %v185 = vshrl.u32 %v183, 16
    %v186 = vshrl.u32 %v184, 16
    %v187 = vxor.u32 %v183, %v185
    %v188 = vxor.u32 %v184, %v186
    %v189 = vmul.u32 %v187, 2246822507
    %v190 = vmul.u32 %v188, 2246822507
    %v191 = vshrl.u32 %v189, 13
    %v192 = vshrl.u32 %v190, 13
    %v193 = vxor.u32 %v189, %v191
    %v194 = vxor.u32 %v190, %v192
    %v195 = vmul.u32 %v193, 3266489909
    %v196 = vmul.u32 %v194, 3266489909
    %v197 = vshrl.u32 %v195, 16
    %v198 = vshrl.u32 %v196, 16
    %v199 = vxor.u32 %v195, %v197
    %v200 = vxor.u32 %v196, %v198
    %vm201 = vcmp.ge.u32.totalorder %v199, 644245094
    %vm202 = vcmp.ge.u32.totalorder %v200, 644245094
    %v203 = vmul.f32 %v161, 1.1764706
    %v204 = vmul.f32 %v164, 1.1764706
    %v205 = vsel %vm201, %v203, 0.0
    %v206 = vsel %vm202, %v204, 0.0
    %v207 = vadd.f32 %v52, %v205
    %v208 = vadd.f32 %v53, %v206
    %209 = vadd.xlane.f32.xlu0 %v207
    %v210 = vpop.xlane.xlu0 %209
    %211 = vadd.xlane.f32.xlu0 %v208
    %v212 = vpop.xlane.xlu0 %211
    %v213 = vrcp.pop 128.0
    %v214 = vmul.f32 %v210, %v213
    %v215 = vmul.f32 %v212, %v213
    %v216 = vsub.f32 %v207, %v214
    %v217 = vsub.f32 %v208, %v215
    %v218 = vmul.f32 %v216, %v216
    %v219 = vmul.f32 %v217, %v217
    %220 = vadd.xlane.f32.xlu0 %v218
    %v221 = vpop.xlane.xlu0 %220
    %222 = vadd.xlane.f32.xlu0 %v219
    %v223 = vpop.xlane.xlu0 %222
    %v224 = vmul.f32 %v221, %v213
    %v225 = vmul.f32 %v223, %v213
    %v226 = vadd.f32 %v224, 1e-05
    %v227 = vadd.f32 %v225, 1e-05
    %v228 = vrsqrt.pop %v226
    %v229 = vrsqrt.pop %v227
    %v230 = vmul.f32 %v216, %v228
    %v231 = vmul.f32 %v217, %v229
    %v232 = vld [vmem:[%s4] sm:$0x1]
    %v234 = vlaneseq
    %v235 = vshrl.u32 %v234, 7
    %v236 = vsub.s32 0, %v235
    %v237 = vrot.slane %v232, %v236
    %v239 = vmul.f32 %v230, %v237
    %v240 = vmul.f32 %v231, %v237
    %v241 = vld [vmem:[%s5] sm:$0x1]
    %v243 = vlaneseq
    %v244 = vshrl.u32 %v243, 7
    %v245 = vsub.s32 0, %v244
    %v246 = vrot.slane %v241, %v245
    %v248 = vadd.f32 %v239, %v246
    %v249 = vadd.f32 %v240, %v246
    %250 = vst [vmem:[#allocation9] sm:$0xff] %v248
    %251 = vst [vmem:[#allocation9 + $0x8] sm:$0xff] %v249
    // Predicated region
    $region30: #{tpu_custom_call.1} parent=1 // pred_check
      _
    $region31: #{tpu_custom_call.1} parent=1 // pred_check_branch
      %253 = sbr.rel (0) target = $region33
    $region32: #{tpu_custom_call.1} parent=1 // pred_region
      %s255 = ssub.s32 256, 256
      %256 = vsyncadd [#allocation6], %s255
      %s257 = sshll.u32 [#allocation9], 4
      %s258 = int_to_ptr.vmem [resolvable:$true] %s257
      %263 = dma.vmem_to_hbm [thread:$0]  %s258, 256, %s6, [#allocation6], 128, 128, 8
    $region33: #{tpu_custom_call.1} parent=1 // pred_fallthru
      _
    // Predicated region
    $region34: #{tpu_custom_call.1} parent=1 // pred_check
      _
    $region35: #{tpu_custom_call.1} parent=1 // pred_check_branch
      %265 = sbr.rel (0) target = $region37
    $region36: #{tpu_custom_call.1} parent=1 // pred_region
      %266 = dma.done [#allocation6], 256
    $region37: #{tpu_custom_call.1} parent=1 // pred_fallthru
      _
    %267 = vsyncpa [#allocation5], 1
    %268 = vsyncpa [#allocation8], 1
    %269 = vsyncpa [#allocation6], 1

</llo_original>
